<compile_context>
chip_gen: v5e
topology: v5e:2x2
jax: 0.10.0
libtpu: 0.0.40
codegen_flags: <defaults>
</compile_context>

<pallas_src>
import jax
import jax.numpy as jnp
from jax.experimental import pallas as pl
from jax.experimental.pallas import tpu as pltpu


def _depatch_proj_kernel(x_ref, w_ref, b_ref, o_ref):
    # x_ref: (TM, Kp), w_ref: (Kp, Np), b_ref: (1, Np), o_ref: (TM, Np)
    acc = jnp.dot(x_ref[...], w_ref[...], preferred_element_type=jnp.float32)
    o_ref[...] = (acc + b_ref[...]).astype(o_ref.dtype)


def depatch_projection(x2d, weight, bias, *, tm_max=2048):
    """y = x2d @ weight.T + bias via a lane-dense, M-tiled Pallas matmul.

    x2d:    (M, K) float32
    weight: (N, K) float32   -- nn.Linear weight (out_features, in_features)
    bias:   (N,)   float32
    returns (M, N) float32
    """
    M, K = x2d.shape
    N = weight.shape[0]

    # Row-packing factor: make the contraction dim a multiple of 128 lanes when
    # possible (also makes the output R*N >= 128 lanes wide for K=32/N=64 cases).
    R = 1
    if K < 128 and 128 % K == 0 and M % (128 // K) == 0:
        R = 128 // K
    Kp, Np, Mp = R * K, R * N, M // R

    w_t = weight.T.astype(jnp.float32)                      # (K, N)
    if R > 1:
        eye = jnp.eye(R, dtype=jnp.float32)
        # Block-diagonal weight: W_bd[r*K + k, r'*N + n] = w_t[k, n] iff r == r'.
        w_bd = (eye[:, None, :, None] * w_t[None, :, None, :]).reshape(Kp, Np)
        bias_p = jnp.tile(bias.astype(jnp.float32), R)
    else:
        w_bd = w_t
        bias_p = bias.astype(jnp.float32)

    x_p = x2d.astype(jnp.float32).reshape(Mp, Kp)           # free reshape (row packing)
    bias2d = bias_p.reshape(1, Np)

    tm = min(tm_max, Mp)
    grid = (pl.cdiv(Mp, tm),)

    cost = pl.CostEstimate(
        flops=2 * Mp * Kp * Np,
        transcendentals=0,
        bytes_accessed=4 * (Mp * Kp + Kp * Np + Mp * Np),
    )

    y_p = pl.pallas_call(
        _depatch_proj_kernel,
        out_shape=jax.ShapeDtypeStruct((Mp, Np), jnp.float32),
        grid=grid,
        in_specs=[
            pl.BlockSpec((tm, Kp), lambda i: (i, 0)),   # streamed row tiles
            pl.BlockSpec((Kp, Np), lambda i: (0, 0)),   # VMEM-resident weight
            pl.BlockSpec((1, Np), lambda i: (0, 0)),    # VMEM-resident bias
        ],
        out_specs=pl.BlockSpec((tm, Np), lambda i: (i, 0)),
        compiler_params=pltpu.CompilerParams(
            dimension_semantics=("parallel",),
        ),
        cost_estimate=cost,
    )(x_p, w_bd, bias2d)

    return y_p.reshape(M, N)


def c_depatch_forward(x, ori, weight, bias, patch_size):
    """JAX/Pallas equivalent of C_DePatch.forward.

    x:      ((b*h_*w_), c, embed_dim) float32
    ori:    tuple (b, c, h, w) of Python ints
    weight: (patch_size**2, embed_dim)  -- nn.Linear weight
    bias:   (patch_size**2,)            -- nn.Linear bias
    returns (b, c, h, w) float32
    """
    bsz, c, h, wdt = ori
    p = patch_size
    h_ = h // p
    w_ = wdt // p
    n_tok, c_in, embed_dim = x.shape
    assert n_tok == bsz * h_ * w_ and c_in == c

    # Hot path: the Linear projection in the Pallas kernel.
    x2d = x.reshape(n_tok * c, embed_dim)
    y2d = depatch_projection(x2d, weight, bias)             # (n_tok*c, p*p)

    # Layout glue: '(b h w) c (p1 p2) -> b c (h p1) (w p2)'  (single XLA transpose).
    y = y2d.reshape(bsz, h_, w_, c, p, p)
    y = jnp.transpose(y, (0, 3, 1, 4, 2, 5))                # b c h_ p1 w_ p2
    return y.reshape(bsz, c, h_ * p, w_ * p)


if __name__ == "__main__":
    # Small, consistent shapes: b=2, c=4, h=w=16, patch_size=8 -> h_=w_=2,
    # embed_dim=32.  Token count = b*h_*w_ = 8.  Packed kernel shape: (8,128)@(128,256).
    b_sz, c, h, w = 2, 4, 16, 16
    patch_size = 8
    embed_dim = 32
    h_, w_ = h // patch_size, w // patch_size

    key = jax.random.PRNGKey(0)
    kx, kw, kb = jax.random.split(key, 3)

    x = jax.random.normal(kx, (b_sz * h_ * w_, c, embed_dim), dtype=jnp.float32)
    # Deterministic parameter init (nn.Linear(embed_dim, patch_size**2) shapes).
    weight = jax.random.normal(kw, (patch_size ** 2, embed_dim), dtype=jnp.float32) * 0.02
    bias = jax.random.normal(kb, (patch_size ** 2,), dtype=jnp.float32) * 0.02

    out = c_depatch_forward(x, (b_sz, c, h, w), weight, bias, patch_size)
    out = jax.block_until_ready(out)
    assert out.shape == (b_sz, c, h, w), out.shape

    # Pure-JAX reference of the same forward pass (high-precision matmul).
    y_ref = jnp.matmul(
        x.reshape(-1, embed_dim), weight.T, precision=jax.lax.Precision.HIGHEST
    ) + bias                                                # (n_tok*c, P^2)
    y_ref = y_ref.reshape(b_sz, h_, w_, c, patch_size, patch_size)
    y_ref = jnp.transpose(y_ref, (0, 3, 1, 4, 2, 5)).reshape(b_sz, c, h, w)
    assert jnp.allclose(out, y_ref, atol=2e-3, rtol=2e-3), \
        float(jnp.max(jnp.abs(out - y_ref)))

    print("KERNEL_OK")
</pallas_src>

<mosaic_0001>
module attributes {stable_mosaic.version = 11 : i64} {
  func.func @_depatch_proj_kernel(%arg0: i32, %arg1: memref<8x128xf32, #tpu.memory_space<vmem>>, %arg2: memref<128x256xf32, #tpu.memory_space<vmem>>, %arg3: memref<1x256xf32, #tpu.memory_space<vmem>>, %arg4: memref<8x256xf32, #tpu.memory_space<vmem>>) attributes {dimension_semantics = [#tpu.dimension_semantics<parallel>], iteration_bounds = array<i64: 1>, scalar_prefetch = 0 : i64, scratch_operands = 0 : i64, tpu.core_type = #tpu.core_type<tc>, window_params = [{transform_indices = @transform_0, window_bounds = array<i64: 8, 128>}, {pipeline_mode = #tpu.pipeline_mode<synchronous>, transform_indices = @transform_1, window_bounds = array<i64: 128, 256>}, {pipeline_mode = #tpu.pipeline_mode<synchronous>, transform_indices = @transform_2, window_bounds = array<i64: 1, 256>}, {transform_indices = @transform_3, window_bounds = array<i64: 8, 256>}]} {
    %c0 = arith.constant 0 : index
    %c0_0 = arith.constant 0 : index
    %0 = vector.load %arg1[%c0, %c0_0] : memref<8x128xf32, #tpu.memory_space<vmem>>, vector<8x128xf32>
    %c0_1 = arith.constant 0 : index
    %c0_2 = arith.constant 0 : index
    %1 = vector.load %arg2[%c0_1, %c0_2] : memref<128x256xf32, #tpu.memory_space<vmem>>, vector<128x256xf32>
    %cst = arith.constant dense<0.000000e+00> : vector<8x256xf32>
    %2 = tpu.matmul %0, %1, %cst {dimension_numbers = #tpu.dot_dimension_numbers<[1], [0], [0], [1], [0, 0, 1, 1], [], []>} : vector<8x128xf32>, vector<128x256xf32>, vector<8x256xf32> -> vector<8x256xf32>
    %c0_3 = arith.constant 0 : index
    %c0_4 = arith.constant 0 : index
    %3 = vector.load %arg3[%c0_3, %c0_4] : memref<1x256xf32, #tpu.memory_space<vmem>>, vector<1x256xf32>
    %4 = vector.broadcast %3 : vector<1x256xf32> to vector<8x256xf32>
    %5 = arith.addf %2, %4 : vector<8x256xf32>
    %c0_5 = arith.constant 0 : index
    %c0_6 = arith.constant 0 : index
    %6 = vector.load %arg4[%c0_5, %c0_6] : memref<8x256xf32, #tpu.memory_space<vmem>>, vector<8x256xf32>
    tpu.vector_store %arg4[%c0_5, %c0_6], %5 {strides = array<i32>} : memref<8x256xf32, #tpu.memory_space<vmem>>, vector<8x256xf32>,
    return
  }
  func.func @transform_0(%arg0: i32) -> (i32, i32) {
    %c0_i32 = arith.constant 0 : i32
    %c0_i32_0 = arith.constant 0 : i32
    return %arg0, %c0_i32 : i32, i32
  }
  func.func @transform_1(%arg0: i32) -> (i32, i32) {
    %c0_i32 = arith.constant 0 : i32
    %c0_i32_0 = arith.constant 0 : i32
    %c0_i32_1 = arith.constant 0 : i32
    return %c0_i32, %c0_i32_0 : i32, i32
  }
  func.func @transform_2(%arg0: i32) -> (i32, i32) {
    %c0_i32 = arith.constant 0 : i32
    %c0_i32_0 = arith.constant 0 : i32
    %c0_i32_1 = arith.constant 0 : i32
    return %c0_i32, %c0_i32_0 : i32, i32
  }
  func.func @transform_3(%arg0: i32) -> (i32, i32) {
    %c0_i32 = arith.constant 0 : i32
    %c0_i32_0 = arith.constant 0 : i32
    return %arg0, %c0_i32 : i32, i32
  }
}

</mosaic_0001>

<llo_original>
// kernel: tpu_custom_call.1
$region0: #{tpu_custom_call.1}
  #allocation0 [shape = 'u32[]', space=smem, size = 0x4, offset = 0x4, fixed_abs, tag = 'smem constant byte address 0x4 - core index']
  #allocation1 [shape = 'u32[72,128]{1,0:T(1,128)}', space=vmem, size = 0x9000, scoped, tag = 'internal scratch']
  %s0 = inlined_call_operand.hbm [shape: f32[8,128], index: 0, kind: input, shape index: {}]
  %s1 = inlined_call_operand.hbm [shape: f32[128,256], index: 1, kind: input, shape index: {}]
  %s2 = inlined_call_operand.hbm [shape: f32[1,256], index: 2, kind: input, shape index: {}]
  %s3 = inlined_call_operand.hbm [shape: f32[8,256], index: 3, kind: output, shape index: {}]
  %s4 = sld [smem:[#allocation0]]
  $region34: #{tpu_custom_call.1} parent=0
    _
  %s6 = ssub.s32 1, %s4
  %s7 = scalar_select 0, %s6, %s4
  $region1: #{tpu_custom_call.1} parent=0
    #allocation2 [shape = 'u8[4096]{0}', space=vmem, size = 0x1000, scoped, tag = 'input window, operand 0, single buffered']
    #allocation3 [shape = 's32[1]{0}', space=sflag, size = 0x4, scoped, tag = 'scoped memory for tpu_custom_call.1']
    #allocation4 [shape = 's32[1]{0}', space=sflag, size = 0x4, scoped, tag = 'scoped memory for tpu_custom_call.1']
    #allocation5 [shape = 'u8[131072]{0}', space=vmem, size = 0x20000, scoped, tag = 'input window, operand 1, single buffered']
    #allocation6 [shape = 's32[1]{0}', space=sflag, size = 0x4, scoped, tag = 'scoped memory for tpu_custom_call.1']
    #allocation7 [shape = 'u8[1024]{0}', space=vmem, size = 0x400, scoped, tag = 'input window, operand 2, single buffered']
    #allocation8 [shape = 'u8[8192]{0}', space=vmem, size = 0x2000, scoped, tag = 'output window, operand 0, single buffered']
    %8 = vsyncpa [#allocation3], 0
    %9 = vsyncpa [#allocation6], 0
    %10 = vsyncpa [#allocation4], 0
    // Predicated region
    $region2: #{tpu_custom_call.1} parent=1 // pred_check
      _
    $region3: #{tpu_custom_call.1} parent=1 // pred_check_branch
      %12 = sbr.rel (0) target = $region5
    $region4: #{tpu_custom_call.1} parent=1 // pred_region
      %14 = vsyncadd [#allocation3], 0
      %s16 = sshll.u32 %s0, 4
      %s17 = int_to_ptr.hbm [resolvable:$true] %s16
      %s18 = sshll.u32 [#allocation2], 4
      %s19 = int_to_ptr.vmem [resolvable:$true] %s18
      %21 = dma.hbm_to_vmem [thread:$0]  %s17, 128, %s19, [#allocation3]
    $region5: #{tpu_custom_call.1} parent=1 // pred_fallthru
      _
    // Predicated region
    $region6: #{tpu_custom_call.1} parent=1 // pred_check
      _
    $region7: #{tpu_custom_call.1} parent=1 // pred_check_branch
      %23 = sbr.rel (0) target = $region9
    $region8: #{tpu_custom_call.1} parent=1 // pred_region
      %25 = vsyncadd [#allocation6], 0
      %s26 = sshll.u32 %s1, 4
      %s27 = int_to_ptr.hbm [resolvable:$true] %s26
      %s28 = sshll.u32 [#allocation5], 4
      %s29 = int_to_ptr.vmem [resolvable:$true] %s28
      %34 = dma.hbm_to_vmem [thread:$0]  %s27, 4096, %s29, [#allocation6], 256, 256, 16
    $region9: #{tpu_custom_call.1} parent=1 // pred_fallthru
      _
    // Predicated region
    $region10: #{tpu_custom_call.1} parent=1 // pred_check
      _
    $region11: #{tpu_custom_call.1} parent=1 // pred_check_branch
      %36 = sbr.rel (0) target = $region13
    $region12: #{tpu_custom_call.1} parent=1 // pred_region
      %38 = vsyncadd [#allocation6], 0
      %s40 = sshll.u32 %s2, 4
      %s41 = int_to_ptr.hbm [resolvable:$true] %s40
      %s42 = sshll.u32 [#allocation7], 4
      %s43 = int_to_ptr.vmem [resolvable:$true] %s42
      %45 = dma.hbm_to_vmem [thread:$0]  %s41, 32, %s43, [#allocation6]
    $region13: #{tpu_custom_call.1} parent=1 // pred_fallthru
      _
    // Predicated region
    $region14: #{tpu_custom_call.1} parent=1 // pred_check
      _
    $region15: #{tpu_custom_call.1} parent=1 // pred_check_branch
      %47 = sbr.rel (0) target = $region17
    $region16: #{tpu_custom_call.1} parent=1 // pred_region
      %49 = dma.done [#allocation3], 128
    $region17: #{tpu_custom_call.1} parent=1 // pred_fallthru
      _
    // Predicated region
    $region18: #{tpu_custom_call.1} parent=1 // pred_check
      _
    $region19: #{tpu_custom_call.1} parent=1 // pred_check_branch
      %51 = sbr.rel (0) target = $region21
    $region20: #{tpu_custom_call.1} parent=1 // pred_region
      %53 = dma.done [#allocation6], 4096
    $region21: #{tpu_custom_call.1} parent=1 // pred_fallthru
      _
    // Predicated region
    $region22: #{tpu_custom_call.1} parent=1 // pred_check
      _
    $region23: #{tpu_custom_call.1} parent=1 // pred_check_branch
      %55 = sbr.rel (0) target = $region25
    $region24: #{tpu_custom_call.1} parent=1 // pred_region
      %57 = dma.done [#allocation6], 32
    $region25: #{tpu_custom_call.1} parent=1 // pred_fallthru
      _
    %v58 = vld [vmem:[#allocation2] sm:$0xff]
    %v59 = vld [vmem:[#allocation5] sm:$0xff]
    %v60 = vld [vmem:[#allocation5 + $0x8] sm:$0xff]
    %v61 = vld [vmem:[#allocation5 + $0x10] sm:$0xff]
    %v62 = vld [vmem:[#allocation5 + $0x18] sm:$0xff]
    %v63 = vld [vmem:[#allocation5 + $0x20] sm:$0xff]
    %v64 = vld [vmem:[#allocation5 + $0x28] sm:$0xff]
    %v65 = vld [vmem:[#allocation5 + $0x30] sm:$0xff]
    %v66 = vld [vmem:[#allocation5 + $0x38] sm:$0xff]
    %v67 = vld [vmem:[#allocation5 + $0x40] sm:$0xff]
    %v68 = vld [vmem:[#allocation5 + $0x48] sm:$0xff]
    %v69 = vld [vmem:[#allocation5 + $0x50] sm:$0xff]
    %v70 = vld [vmem:[#allocation5 + $0x58] sm:$0xff]
    %v71 = vld [vmem:[#allocation5 + $0x60] sm:$0xff]
    %v72 = vld [vmem:[#allocation5 + $0x68] sm:$0xff]
    %v73 = vld [vmem:[#allocation5 + $0x70] sm:$0xff]
    %v74 = vld [vmem:[#allocation5 + $0x78] sm:$0xff]
    %v75 = vld [vmem:[#allocation5 + $0x80] sm:$0xff]
    %v76 = vld [vmem:[#allocation5 + $0x88] sm:$0xff]
    %v77 = vld [vmem:[#allocation5 + $0x90] sm:$0xff]
    %v78 = vld [vmem:[#allocation5 + $0x98] sm:$0xff]
    %v79 = vld [vmem:[#allocation5 + $0xa0] sm:$0xff]
    %v80 = vld [vmem:[#allocation5 + $0xa8] sm:$0xff]
    %v81 = vld [vmem:[#allocation5 + $0xb0] sm:$0xff]
    %v82 = vld [vmem:[#allocation5 + $0xb8] sm:$0xff]
    %v83 = vld [vmem:[#allocation5 + $0xc0] sm:$0xff]
    %v84 = vld [vmem:[#allocation5 + $0xc8] sm:$0xff]
    %v85 = vld [vmem:[#allocation5 + $0xd0] sm:$0xff]
    %v86 = vld [vmem:[#allocation5 + $0xd8] sm:$0xff]
    %v87 = vld [vmem:[#allocation5 + $0xe0] sm:$0xff]
    %v88 = vld [vmem:[#allocation5 + $0xe8] sm:$0xff]
    %v89 = vld [vmem:[#allocation5 + $0xf0] sm:$0xff]
    %v90 = vld [vmem:[#allocation5 + $0xf8] sm:$0xff]
    %v91 = vld [vmem:[#allocation7] sm:$0x3]
    %v93 = vperm.slane %v91, 0
    %v94 = vperm.slane %v91, 1
    %97 = vmatpush.msra.mxu0 %v89
    %98 = vmatpush.msra.mxu0 %v87
    %99 = vmatpush.msra.mxu0 %v85
    %100 = vmatpush.msra.mxu0 %v83
    %101 = vmatpush.msra.mxu0 %v81
    %102 = vmatpush.msra.mxu0 %v79
    %103 = vmatpush.msra.mxu0 %v77
    %104 = vmatpush.msra.mxu0 %v75
    %105 = vmatpush.msra.mxu0 %v73
    %106 = vmatpush.msra.mxu0 %v71
    %107 = vmatpush.msra.mxu0 %v69
    %108 = vmatpush.msra.mxu0 %v67
    %109 = vmatpush.msra.mxu0 %v65
    %110 = vmatpush.msra.mxu0 %v63
    %111 = vmatpush.msra.mxu0 %v61
    %112 = vmatpush.msra.mxu0 %v59
    %113 = vmatmul.f32.gmra.mxu0 %v58
    %v114 = vpop.f32.mrf.mxu0
    %v115 = vadd.f32 %v93, %v114
    %116 = vdwg.mxu0
    %117 = vmatpush.msra.mxu0 %v90
    %118 = vmatpush.msra.mxu0 %v88
    %119 = vmatpush.msra.mxu0 %v86
    %120 = vmatpush.msra.mxu0 %v84
    %121 = vmatpush.msra.mxu0 %v82
    %122 = vmatpush.msra.mxu0 %v80
    %123 = vmatpush.msra.mxu0 %v78
    %124 = vmatpush.msra.mxu0 %v76
    %125 = vmatpush.msra.mxu0 %v74
    %126 = vmatpush.msra.mxu0 %v72
    %127 = vmatpush.msra.mxu0 %v70
    %128 = vmatpush.msra.mxu0 %v68
    %129 = vmatpush.msra.mxu0 %v66
    %130 = vmatpush.msra.mxu0 %v64
    %131 = vmatpush.msra.mxu0 %v62
    %132 = vmatpush.msra.mxu0 %v60
    %133 = vmatmul.f32.gmra.mxu0 %v58
    %v134 = vpop.f32.mrf.mxu0
    %v135 = vadd.f32 %v94, %v134
    %136 = vdwg.mxu0
    %137 = vst [vmem:[#allocation8] sm:$0xff] %v115
    %138 = vst [vmem:[#allocation8 + $0x8] sm:$0xff] %v135
    // Predicated region
    $region26: #{tpu_custom_call.1} parent=1 // pred_check
      _
    $region27: #{tpu_custom_call.1} parent=1 // pred_check_branch
      %140 = sbr.rel (0) target = $region29
    $region28: #{tpu_custom_call.1} parent=1 // pred_region
      %142 = vsyncadd [#allocation4], 0
      %s144 = sshll.u32 [#allocation8], 4
      %s145 = int_to_ptr.vmem [resolvable:$true] %s144
      %s146 = sshll.u32 %s3, 4
      %s147 = int_to_ptr.hbm [resolvable:$true] %s146
      %149 = dma.vmem_to_hbm [thread:$0]  %s145, 256, %s147, [#allocation4]
    $region29: #{tpu_custom_call.1} parent=1 // pred_fallthru
      _
    // Predicated region
    $region30: #{tpu_custom_call.1} parent=1 // pred_check
      _
    $region31: #{tpu_custom_call.1} parent=1 // pred_check_branch
      %151 = sbr.rel (0) target = $region33
    $region32: #{tpu_custom_call.1} parent=1 // pred_region
      %153 = dma.done [#allocation4], 256
    $region33: #{tpu_custom_call.1} parent=1 // pred_fallthru
      _
    %154 = vsyncpa [#allocation3], 1
    %155 = vsyncpa [#allocation6], 1
    %156 = vsyncpa [#allocation4], 1

</llo_original>
